<compile_context>
chip_gen: v7x
topology: tpu7x:2x2x1
jax: 0.10.0
libtpu: 0.0.40
codegen_flags: <defaults>
</compile_context>

<pallas_src>
import jax
import jax.numpy as jnp
from jax import lax
from jax.experimental import pallas as pl
from jax.experimental.pallas import tpu as pltpu

HIDDEN = 768
LANE = 128
SUBLANE = 8


def _round_up(x, m):
    return (x + m - 1) // m * m


def _linear_kernel(x_ref, w_ref, b_ref, o_ref):
    # x_ref: (TM, 768)   VMEM  (one tile of rows)
    # w_ref: (Cpad, 768) VMEM  (resident across the grid)
    # b_ref: (1, Cpad)   VMEM  (resident across the grid)
    # o_ref: (TM, Cpad)  VMEM  (lane-dense output tile)
    acc = lax.dot_general(
        x_ref[...],
        w_ref[...],
        dimension_numbers=(((1,), (1,)), ((), ())),  # contract on shared 768 axis
        preferred_element_type=jnp.float32,
    )
    o_ref[...] = (acc + b_ref[...]).astype(o_ref.dtype)


def relation_prediction_head(x, weight, bias, *, tile_m=512):
    """Forward pass of RelationPredictionHead.

    x:      (..., 768)           float32
    weight: (num_classes, 768)   PyTorch nn.Linear layout
    bias:   (num_classes,)
    returns (..., num_classes)
    """
    num_classes = weight.shape[0]
    lead_shape = x.shape[:-1]
    x2d = x.reshape(-1, HIDDEN)
    m = x2d.shape[0]

    # Lane-dense output: pad class dim to a multiple of 128 with zeros.
    cpad = _round_up(num_classes, LANE)
    w_pad = jnp.zeros((cpad, HIDDEN), weight.dtype).at[:num_classes, :].set(weight)
    b_pad = jnp.zeros((1, cpad), bias.dtype).at[0, :num_classes].set(bias)

    # Row tile: big enough to hide DMA, small enough for every chip's scoped
    # VMEM (512 rows * 768 * 4B = 1.5 MiB per buffer, double-buffered).
    tm = min(tile_m, _round_up(m, SUBLANE))
    grid = (pl.cdiv(m, tm),)

    itemsize = jnp.dtype(x.dtype).itemsize
    cost = pl.CostEstimate(
        flops=2 * m * HIDDEN * cpad,
        transcendentals=0,
        bytes_accessed=(m * HIDDEN + cpad * HIDDEN + cpad + m * cpad) * itemsize,
    )

    out = pl.pallas_call(
        _linear_kernel,
        out_shape=jax.ShapeDtypeStruct((m, cpad), x.dtype),
        grid_spec=pltpu.PrefetchScalarGridSpec(
            num_scalar_prefetch=0,
            grid=grid,
            in_specs=[
                pl.BlockSpec((tm, HIDDEN), lambda i: (i, 0)),     # streamed rows
                pl.BlockSpec((cpad, HIDDEN), lambda i: (0, 0)),   # resident weight
                pl.BlockSpec((1, cpad), lambda i: (0, 0)),        # resident bias
            ],
            out_specs=pl.BlockSpec((tm, cpad), lambda i: (i, 0)),
        ),
        compiler_params=pltpu.CompilerParams(
            dimension_semantics=("parallel",),  # shard M loop across TCs (v7x)
        ),
        cost_estimate=cost,
    )(x2d, w_pad, b_pad)

    # Slice off the zero-padded classes and restore leading dims.
    return out[:, :num_classes].reshape(*lead_shape, num_classes)


if __name__ == "__main__":
    key = jax.random.PRNGKey(0)
    k_x, k_w, k_b = jax.random.split(key, 3)

    num_classes = 16
    batch, seq = 2, 8

    # Deterministic synthetic parameters (shapes from nn.Linear(768, num_classes)).
    # PyTorch init is U(-1/sqrt(768), 1/sqrt(768)); reproduce that range.
    bound = 1.0 / (HIDDEN ** 0.5)
    weight = jax.random.uniform(k_w, (num_classes, HIDDEN), jnp.float32, -bound, bound)
    bias = jax.random.uniform(k_b, (num_classes,), jnp.float32, -bound, bound)

    x = jax.random.normal(k_x, (batch, seq, HIDDEN), jnp.float32)

    out = relation_prediction_head(x, weight, bias)
    out = jax.block_until_ready(out)

    # Sanity check against plain-JAX reference.
    ref = x @ weight.T + bias
    assert out.shape == (batch, seq, num_classes)
    assert jnp.allclose(out, ref, atol=1e-4, rtol=1e-4)

    print("KERNEL_OK")
</pallas_src>

<mosaic_0001>
module attributes {stable_mosaic.version = 11 : i64} {
  func.func @_linear_kernel(%arg0: i32, %arg1: memref<16x768xf32, #tpu.memory_space<vmem>>, %arg2: memref<128x768xf32, #tpu.memory_space<vmem>>, %arg3: memref<1x128xf32, #tpu.memory_space<vmem>>, %arg4: memref<16x128xf32, #tpu.memory_space<vmem>>) attributes {dimension_semantics = [#tpu.dimension_semantics<parallel>], iteration_bounds = array<i64: 1>, scalar_prefetch = 0 : i64, scratch_operands = 0 : i64, tpu.core_type = #tpu.core_type<tc>, window_params = [{transform_indices = @transform_0, window_bounds = array<i64: 16, 768>}, {pipeline_mode = #tpu.pipeline_mode<synchronous>, transform_indices = @transform_1, window_bounds = array<i64: 128, 768>}, {pipeline_mode = #tpu.pipeline_mode<synchronous>, transform_indices = @transform_2, window_bounds = array<i64: 1, 128>}, {transform_indices = @transform_3, window_bounds = array<i64: 16, 128>}]} {
    %c0 = arith.constant 0 : index
    %c0_0 = arith.constant 0 : index
    %0 = vector.load %arg1[%c0, %c0_0] : memref<16x768xf32, #tpu.memory_space<vmem>>, vector<16x768xf32>
    %c0_1 = arith.constant 0 : index
    %c0_2 = arith.constant 0 : index
    %1 = vector.load %arg2[%c0_1, %c0_2] : memref<128x768xf32, #tpu.memory_space<vmem>>, vector<128x768xf32>
    %cst = arith.constant dense<0.000000e+00> : vector<16x128xf32>
    %2 = tpu.matmul %0, %1, %cst {dimension_numbers = #tpu.dot_dimension_numbers<[1], [1], [0], [0], [0, 0, 1, 0], [], []>} : vector<16x768xf32>, vector<128x768xf32>, vector<16x128xf32> -> vector<16x128xf32>
    %c0_3 = arith.constant 0 : index
    %c0_4 = arith.constant 0 : index
    %3 = vector.load %arg3[%c0_3, %c0_4] : memref<1x128xf32, #tpu.memory_space<vmem>>, vector<1x128xf32>
    %4 = vector.broadcast %3 : vector<1x128xf32> to vector<16x128xf32>
    %5 = arith.addf %2, %4 : vector<16x128xf32>
    %c0_5 = arith.constant 0 : index
    %c0_6 = arith.constant 0 : index
    %6 = vector.load %arg4[%c0_5, %c0_6] : memref<16x128xf32, #tpu.memory_space<vmem>>, vector<16x128xf32>
    tpu.vector_store %arg4[%c0_5, %c0_6], %5 {strides = array<i32>} : memref<16x128xf32, #tpu.memory_space<vmem>>, vector<16x128xf32>,
    return
  }
  func.func @transform_0(%arg0: i32) -> (i32, i32) {
    %c0_i32 = arith.constant 0 : i32
    %c0_i32_0 = arith.constant 0 : i32
    return %arg0, %c0_i32 : i32, i32
  }
  func.func @transform_1(%arg0: i32) -> (i32, i32) {
    %c0_i32 = arith.constant 0 : i32
    %c0_i32_0 = arith.constant 0 : i32
    %c0_i32_1 = arith.constant 0 : i32
    return %c0_i32, %c0_i32_0 : i32, i32
  }
  func.func @transform_2(%arg0: i32) -> (i32, i32) {
    %c0_i32 = arith.constant 0 : i32
    %c0_i32_0 = arith.constant 0 : i32
    %c0_i32_1 = arith.constant 0 : i32
    return %c0_i32, %c0_i32_0 : i32, i32
  }
  func.func @transform_3(%arg0: i32) -> (i32, i32) {
    %c0_i32 = arith.constant 0 : i32
    %c0_i32_0 = arith.constant 0 : i32
    return %arg0, %c0_i32 : i32, i32
  }
}

</mosaic_0001>

<llo_original>
// kernel: tpu_custom_call.1
$region0: #{tpu_custom_call.1}
  #allocation0 [shape = 'u32[]', space=smem, size = 0x4, offset = 0x4, fixed_abs, tag = 'smem constant byte address 0x4 - core index']
  #allocation1 [shape = 'u32[144,128]{1,0:T(1,128)}', space=vmem, size = 0x12000, scoped, tag = 'internal scratch']
  %s0 = inlined_call_operand.hbm [shape: f32[16,768], index: 0, kind: input, shape index: {}]
  %s1 = inlined_call_operand.hbm [shape: f32[128,768], index: 1, kind: input, shape index: {}]
  %s2 = inlined_call_operand.vmem [shape: f32[1,128], index: 2, kind: input, shape index: {}]
  %s3 = inlined_call_operand.hbm [shape: f32[16,128], index: 3, kind: output, shape index: {}]
  %s4 = sld [smem:[#allocation0]]
  $region30: #{tpu_custom_call.1} parent=0
    _
  %s6 = ssub.s32 1, %s4
  %s7 = scalar_select 0, %s6, %s4
  $region1: #{tpu_custom_call.1} parent=0
    #allocation2 [shape = 'u8[49152]{0}', space=vmem, size = 0xc000, scoped, tag = 'input window, operand 0, single buffered']
    #allocation3 [shape = 's32[1]{0}', space=sflag, size = 0x4, scoped, tag = 'scoped memory for tpu_custom_call.1']
    #allocation4 [shape = 's32[1]{0}', space=sflag, size = 0x4, scoped, tag = 'scoped memory for tpu_custom_call.1']
    #allocation5 [shape = 'u8[393216]{0}', space=vmem, size = 0x60000, scoped, tag = 'input window, operand 1, single buffered']
    #allocation6 [shape = 's32[1]{0}', space=sflag, size = 0x4, scoped, tag = 'scoped memory for tpu_custom_call.1']
    #allocation7 [shape = 'u8[8192]{0}', space=vmem, size = 0x2000, scoped, tag = 'output window, operand 0, single buffered']
    %8 = vsyncpa [#allocation3], 0
    %9 = vsyncpa [#allocation6], 0
    %10 = vsyncpa [#allocation4], 0
    // Predicated region
    $region2: #{tpu_custom_call.1} parent=1 // pred_check
      _
    $region3: #{tpu_custom_call.1} parent=1 // pred_check_branch
      %12 = sbr.rel (0) target = $region5
    $region4: #{tpu_custom_call.1} parent=1 // pred_region
      %s14 = ssub.s32 1536, 1536
      %15 = vsyncadd [#allocation3], %s14
      %s16 = sshll.u32 [#allocation2], 4
      %s17 = int_to_ptr.vmem [resolvable:$true] %s16
      %22 = dma.hbm_to_vmem [thread:$0]  %s0, 1536, %s17, [#allocation3], 768, 768, 48
    $region5: #{tpu_custom_call.1} parent=1 // pred_fallthru
      _
    // Predicated region
    $region6: #{tpu_custom_call.1} parent=1 // pred_check
      _
    $region7: #{tpu_custom_call.1} parent=1 // pred_check_branch
      %24 = sbr.rel (0) target = $region9
    $region8: #{tpu_custom_call.1} parent=1 // pred_region
      %s26 = ssub.s32 12288, 12288
      %27 = vsyncadd [#allocation6], %s26
      %s28 = sshll.u32 [#allocation5], 4
      %s29 = int_to_ptr.vmem [resolvable:$true] %s28
      %34 = dma.hbm_to_vmem [thread:$0]  %s1, 12288, %s29, [#allocation6], 768, 768, 48
    $region9: #{tpu_custom_call.1} parent=1 // pred_fallthru
      _
    // Predicated region
    $region10: #{tpu_custom_call.1} parent=1 // pred_check
      _
    $region11: #{tpu_custom_call.1} parent=1 // pred_check_branch
      %36 = sbr.rel (0) target = $region13
    $region12: #{tpu_custom_call.1} parent=1 // pred_region
      _
    $region13: #{tpu_custom_call.1} parent=1 // pred_fallthru
      _
    // Predicated region
    $region14: #{tpu_custom_call.1} parent=1 // pred_check
      _
    $region15: #{tpu_custom_call.1} parent=1 // pred_check_branch
      %38 = sbr.rel (0) target = $region17
    $region16: #{tpu_custom_call.1} parent=1 // pred_region
      %39 = dma.done [#allocation3], 1536
    $region17: #{tpu_custom_call.1} parent=1 // pred_fallthru
      _
    // Predicated region
    $region18: #{tpu_custom_call.1} parent=1 // pred_check
      _
    $region19: #{tpu_custom_call.1} parent=1 // pred_check_branch
      %41 = sbr.rel (0) target = $region21
    $region20: #{tpu_custom_call.1} parent=1 // pred_region
      %42 = dma.done [#allocation6], 12288
    $region21: #{tpu_custom_call.1} parent=1 // pred_fallthru
      _
    %v43 = vld [vmem:[#allocation2] sm:$0xff]
    %v44 = vld [vmem:[#allocation2 + $0x8] sm:$0xff]
    %v45 = vld [vmem:[#allocation2 + $0x10] sm:$0xff]
    %v46 = vld [vmem:[#allocation2 + $0x18] sm:$0xff]
    %v47 = vld [vmem:[#allocation2 + $0x20] sm:$0xff]
    %v48 = vld [vmem:[#allocation2 + $0x28] sm:$0xff]
    %v49 = vld [vmem:[#allocation2 + $0x30] sm:$0xff]
    %v50 = vld [vmem:[#allocation2 + $0x38] sm:$0xff]
    %v51 = vld [vmem:[#allocation2 + $0x40] sm:$0xff]
    %v52 = vld [vmem:[#allocation2 + $0x48] sm:$0xff]
    %v53 = vld [vmem:[#allocation2 + $0x50] sm:$0xff]
    %v54 = vld [vmem:[#allocation2 + $0x58] sm:$0xff]
    %v55 = vld [vmem:[#allocation5] sm:$0xff]
    %v56 = vld [vmem:[#allocation5 + $0x8] sm:$0xff]
    %v57 = vld [vmem:[#allocation5 + $0x10] sm:$0xff]
    %v58 = vld [vmem:[#allocation5 + $0x18] sm:$0xff]
    %v59 = vld [vmem:[#allocation5 + $0x20] sm:$0xff]
    %v60 = vld [vmem:[#allocation5 + $0x28] sm:$0xff]
    %v61 = vld [vmem:[#allocation5 + $0x30] sm:$0xff]
    %v62 = vld [vmem:[#allocation5 + $0x38] sm:$0xff]
    %v63 = vld [vmem:[#allocation5 + $0x40] sm:$0xff]
    %v64 = vld [vmem:[#allocation5 + $0x48] sm:$0xff]
    %v65 = vld [vmem:[#allocation5 + $0x50] sm:$0xff]
    %v66 = vld [vmem:[#allocation5 + $0x58] sm:$0xff]
    %v67 = vld [vmem:[#allocation5 + $0x60] sm:$0xff]
    %v68 = vld [vmem:[#allocation5 + $0x68] sm:$0xff]
    %v69 = vld [vmem:[#allocation5 + $0x70] sm:$0xff]
    %v70 = vld [vmem:[#allocation5 + $0x78] sm:$0xff]
    %v71 = vld [vmem:[#allocation5 + $0x80] sm:$0xff]
    %v72 = vld [vmem:[#allocation5 + $0x88] sm:$0xff]
    %v73 = vld [vmem:[#allocation5 + $0x90] sm:$0xff]
    %v74 = vld [vmem:[#allocation5 + $0x98] sm:$0xff]
    %v75 = vld [vmem:[#allocation5 + $0xa0] sm:$0xff]
    %v76 = vld [vmem:[#allocation5 + $0xa8] sm:$0xff]
    %v77 = vld [vmem:[#allocation5 + $0xb0] sm:$0xff]
    %v78 = vld [vmem:[#allocation5 + $0xb8] sm:$0xff]
    %v79 = vld [vmem:[#allocation5 + $0xc0] sm:$0xff]
    %v80 = vld [vmem:[#allocation5 + $0xc8] sm:$0xff]
    %v81 = vld [vmem:[#allocation5 + $0xd0] sm:$0xff]
    %v82 = vld [vmem:[#allocation5 + $0xd8] sm:$0xff]
    %v83 = vld [vmem:[#allocation5 + $0xe0] sm:$0xff]
    %v84 = vld [vmem:[#allocation5 + $0xe8] sm:$0xff]
    %v85 = vld [vmem:[#allocation5 + $0xf0] sm:$0xff]
    %v86 = vld [vmem:[#allocation5 + $0xf8] sm:$0xff]
    %v87 = vld [vmem:[#allocation5 + $0x100] sm:$0xff]
    %v88 = vld [vmem:[#allocation5 + $0x108] sm:$0xff]
    %v89 = vld [vmem:[#allocation5 + $0x110] sm:$0xff]
    %v90 = vld [vmem:[#allocation5 + $0x118] sm:$0xff]
    %v91 = vld [vmem:[#allocation5 + $0x120] sm:$0xff]
    %v92 = vld [vmem:[#allocation5 + $0x128] sm:$0xff]
    %v93 = vld [vmem:[#allocation5 + $0x130] sm:$0xff]
    %v94 = vld [vmem:[#allocation5 + $0x138] sm:$0xff]
    %v95 = vld [vmem:[#allocation5 + $0x140] sm:$0xff]
    %v96 = vld [vmem:[#allocation5 + $0x148] sm:$0xff]
    %v97 = vld [vmem:[#allocation5 + $0x150] sm:$0xff]
    %v98 = vld [vmem:[#allocation5 + $0x158] sm:$0xff]
    %v99 = vld [vmem:[#allocation5 + $0x160] sm:$0xff]
    %v100 = vld [vmem:[#allocation5 + $0x168] sm:$0xff]
    %v101 = vld [vmem:[#allocation5 + $0x170] sm:$0xff]
    %v102 = vld [vmem:[#allocation5 + $0x178] sm:$0xff]
    %v103 = vld [vmem:[#allocation5 + $0x180] sm:$0xff]
    %v104 = vld [vmem:[#allocation5 + $0x188] sm:$0xff]
    %v105 = vld [vmem:[#allocation5 + $0x190] sm:$0xff]
    %v106 = vld [vmem:[#allocation5 + $0x198] sm:$0xff]
    %v107 = vld [vmem:[#allocation5 + $0x1a0] sm:$0xff]
    %v108 = vld [vmem:[#allocation5 + $0x1a8] sm:$0xff]
    %v109 = vld [vmem:[#allocation5 + $0x1b0] sm:$0xff]
    %v110 = vld [vmem:[#allocation5 + $0x1b8] sm:$0xff]
    %v111 = vld [vmem:[#allocation5 + $0x1c0] sm:$0xff]
    %v112 = vld [vmem:[#allocation5 + $0x1c8] sm:$0xff]
    %v113 = vld [vmem:[#allocation5 + $0x1d0] sm:$0xff]
    %v114 = vld [vmem:[#allocation5 + $0x1d8] sm:$0xff]
    %v115 = vld [vmem:[#allocation5 + $0x1e0] sm:$0xff]
    %v116 = vld [vmem:[#allocation5 + $0x1e8] sm:$0xff]
    %v117 = vld [vmem:[#allocation5 + $0x1f0] sm:$0xff]
    %v118 = vld [vmem:[#allocation5 + $0x1f8] sm:$0xff]
    %v119 = vld [vmem:[#allocation5 + $0x200] sm:$0xff]
    %v120 = vld [vmem:[#allocation5 + $0x208] sm:$0xff]
    %v121 = vld [vmem:[#allocation5 + $0x210] sm:$0xff]
    %v122 = vld [vmem:[#allocation5 + $0x218] sm:$0xff]
    %v123 = vld [vmem:[#allocation5 + $0x220] sm:$0xff]
    %v124 = vld [vmem:[#allocation5 + $0x228] sm:$0xff]
    %v125 = vld [vmem:[#allocation5 + $0x230] sm:$0xff]
    %v126 = vld [vmem:[#allocation5 + $0x238] sm:$0xff]
    %v127 = vld [vmem:[#allocation5 + $0x240] sm:$0xff]
    %v128 = vld [vmem:[#allocation5 + $0x248] sm:$0xff]
    %v129 = vld [vmem:[#allocation5 + $0x250] sm:$0xff]
    %v130 = vld [vmem:[#allocation5 + $0x258] sm:$0xff]
    %v131 = vld [vmem:[#allocation5 + $0x260] sm:$0xff]
    %v132 = vld [vmem:[#allocation5 + $0x268] sm:$0xff]
    %v133 = vld [vmem:[#allocation5 + $0x270] sm:$0xff]
    %v134 = vld [vmem:[#allocation5 + $0x278] sm:$0xff]
    %v135 = vld [vmem:[#allocation5 + $0x280] sm:$0xff]
    %v136 = vld [vmem:[#allocation5 + $0x288] sm:$0xff]
    %v137 = vld [vmem:[#allocation5 + $0x290] sm:$0xff]
    %v138 = vld [vmem:[#allocation5 + $0x298] sm:$0xff]
    %v139 = vld [vmem:[#allocation5 + $0x2a0] sm:$0xff]
    %v140 = vld [vmem:[#allocation5 + $0x2a8] sm:$0xff]
    %v141 = vld [vmem:[#allocation5 + $0x2b0] sm:$0xff]
    %v142 = vld [vmem:[#allocation5 + $0x2b8] sm:$0xff]
    %v143 = vld [vmem:[#allocation5 + $0x2c0] sm:$0xff]
    %v144 = vld [vmem:[#allocation5 + $0x2c8] sm:$0xff]
    %v145 = vld [vmem:[#allocation5 + $0x2d0] sm:$0xff]
    %v146 = vld [vmem:[#allocation5 + $0x2d8] sm:$0xff]
    %v147 = vld [vmem:[#allocation5 + $0x2e0] sm:$0xff]
    %v148 = vld [vmem:[#allocation5 + $0x2e8] sm:$0xff]
    %v149 = vld [vmem:[#allocation5 + $0x2f0] sm:$0xff]
    %v150 = vld [vmem:[#allocation5 + $0x2f8] sm:$0xff]
    %v151 = vld [vmem:[%s2] sm:$0x1]
    %v153 = vlaneseq
    %v154 = vshrl.u32 %v153, 7
    %v155 = vsub.s32 0, %v154
    %v156 = vrot.slane %v151, %v155
    %158 = vmatprep.subr.mxu0 %v56
    %159 = vmatpush1.xpose.msra.mxu0 %v55
    %160 = vmatprep.subr.mxu0 %v62
    %161 = vmatpush1.xpose.msra.mxu0 %v61
    %162 = vmatprep.subr.mxu0 %v68
    %163 = vmatpush1.xpose.msra.mxu0 %v67
    %164 = vmatprep.subr.mxu0 %v74
    %165 = vmatpush1.xpose.msra.mxu0 %v73
    %166 = vmatprep.subr.mxu0 %v80
    %167 = vmatpush1.xpose.msra.mxu0 %v79
    %168 = vmatprep.subr.mxu0 %v86
    %169 = vmatpush1.xpose.msra.mxu0 %v85
    %170 = vmatprep.subr.mxu0 %v92
    %171 = vmatpush1.xpose.msra.mxu0 %v91
    %172 = vmatprep.subr.mxu0 %v98
    %173 = vmatpush1.xpose.msra.mxu0 %v97
    %174 = vmatprep.subr.mxu0 %v104
    %175 = vmatpush1.xpose.msra.mxu0 %v103
    %176 = vmatprep.subr.mxu0 %v110
    %177 = vmatpush1.xpose.msra.mxu0 %v109
    %178 = vmatprep.subr.mxu0 %v116
    %179 = vmatpush1.xpose.msra.mxu0 %v115
    %180 = vmatprep.subr.mxu0 %v122
    %181 = vmatpush1.xpose.msra.mxu0 %v121
    %182 = vmatprep.subr.mxu0 %v128
    %183 = vmatpush1.xpose.msra.mxu0 %v127
    %184 = vmatprep.subr.mxu0 %v134
    %185 = vmatpush1.xpose.msra.mxu0 %v133
    %186 = vmatprep.subr.mxu0 %v140
    %187 = vmatpush1.xpose.msra.mxu0 %v139
    %188 = vmatprep.subr.mxu0 %v146
    %189 = vmatpush1.xpose.msra.mxu0 %v145
    %190 = vmatprep.subr.mxu0 0.0
    %191 = vmatpush1.xpose.msra.mxu0 0.0
    %192 = vmatprep.subr.mxu0 0.0
    %193 = vmatpush1.xpose.msra.mxu0 0.0
    %194 = vmatprep.subr.mxu0 0.0
    %195 = vmatpush1.xpose.msra.mxu0 0.0
    %196 = vmatprep.subr.mxu0 0.0
    %197 = vmatpush1.xpose.msra.mxu0 0.0
    %198 = vmatprep.subr.mxu0 0.0
    %199 = vmatpush1.xpose.msra.mxu0 0.0
    %200 = vmatprep.subr.mxu0 0.0
    %201 = vmatpush1.xpose.msra.mxu0 0.0
    %202 = vmatprep.subr.mxu0 0.0
    %203 = vmatpush1.xpose.msra.mxu0 0.0
    %204 = vmatprep.subr.mxu0 0.0
    %205 = vmatpush1.xpose.msra.mxu0 0.0
    %206 = vmatprep.subr.mxu0 0.0
    %207 = vmatpush1.xpose.msra.mxu0 0.0
    %208 = vmatprep.subr.mxu0 0.0
    %209 = vmatpush1.xpose.msra.mxu0 0.0
    %210 = vmatprep.subr.mxu0 0.0
    %211 = vmatpush1.xpose.msra.mxu0 0.0
    %212 = vmatprep.subr.mxu0 0.0
    %213 = vmatpush1.xpose.msra.mxu0 0.0
    %214 = vmatprep.subr.mxu0 0.0
    %215 = vmatpush1.xpose.msra.mxu0 0.0
    %216 = vmatprep.subr.mxu0 0.0
    %217 = vmatpush1.xpose.msra.mxu0 0.0
    %218 = vmatprep.subr.mxu0 0.0
    %219 = vmatpush1.xpose.msra.mxu0 0.0
    %220 = vmatprep.subr.mxu0 0.0
    %221 = vmatpush1.xpose.msra.mxu0 0.0
    %222 = vmatprep.mubr.f32.mxu0 %v44
    %223 = vmatmul.mubr.f32.gmra.mrb[0].mxu0 %v43
    %v224 = vpop.f32.mrb[0].mxu0
    %v225 = vadd.f32 %v156, %v224
    %v226 = vpop.f32.mrb[0].mxu0
    %227 = vmatprep.mubr.f32.mxu0 %v50
    %228 = vmatmul.mubr.f32.gmra.mrb[0].mxu0 %v49
    %v229 = vpop.f32.mrb[0].mxu0
    %v230 = vadd.f32 %v156, %v229
    %v231 = vpop.f32.mrb[0].mxu0
    %232 = vdwg.mxu0
    %233 = vmatprep.subr.mxu0 %v58
    %234 = vmatpush1.xpose.msra.mxu0 %v57
    %235 = vmatprep.subr.mxu0 %v64
    %236 = vmatpush1.xpose.msra.mxu0 %v63
    %237 = vmatprep.subr.mxu0 %v70
    %238 = vmatpush1.xpose.msra.mxu0 %v69
    %239 = vmatprep.subr.mxu0 %v76
    %240 = vmatpush1.xpose.msra.mxu0 %v75
    %241 = vmatprep.subr.mxu0 %v82
    %242 = vmatpush1.xpose.msra.mxu0 %v81
    %243 = vmatprep.subr.mxu0 %v88
    %244 = vmatpush1.xpose.msra.mxu0 %v87
    %245 = vmatprep.subr.mxu0 %v94
    %246 = vmatpush1.xpose.msra.mxu0 %v93
    %247 = vmatprep.subr.mxu0 %v100
    %248 = vmatpush1.xpose.msra.mxu0 %v99
    %249 = vmatprep.subr.mxu0 %v106
    %250 = vmatpush1.xpose.msra.mxu0 %v105
    %251 = vmatprep.subr.mxu0 %v112
    %252 = vmatpush1.xpose.msra.mxu0 %v111
    %253 = vmatprep.subr.mxu0 %v118
    %254 = vmatpush1.xpose.msra.mxu0 %v117
    %255 = vmatprep.subr.mxu0 %v124
    %256 = vmatpush1.xpose.msra.mxu0 %v123
    %257 = vmatprep.subr.mxu0 %v130
    %258 = vmatpush1.xpose.msra.mxu0 %v129
    %259 = vmatprep.subr.mxu0 %v136
    %260 = vmatpush1.xpose.msra.mxu0 %v135
    %261 = vmatprep.subr.mxu0 %v142
    %262 = vmatpush1.xpose.msra.mxu0 %v141
    %263 = vmatprep.subr.mxu0 %v148
    %264 = vmatpush1.xpose.msra.mxu0 %v147
    %265 = vmatprep.subr.mxu0 0.0
    %266 = vmatpush1.xpose.msra.mxu0 0.0
    %267 = vmatprep.subr.mxu0 0.0
    %268 = vmatpush1.xpose.msra.mxu0 0.0
    %269 = vmatprep.subr.mxu0 0.0
    %270 = vmatpush1.xpose.msra.mxu0 0.0
    %271 = vmatprep.subr.mxu0 0.0
    %272 = vmatpush1.xpose.msra.mxu0 0.0
    %273 = vmatprep.subr.mxu0 0.0
    %274 = vmatpush1.xpose.msra.mxu0 0.0
    %275 = vmatprep.subr.mxu0 0.0
    %276 = vmatpush1.xpose.msra.mxu0 0.0
    %277 = vmatprep.subr.mxu0 0.0
    %278 = vmatpush1.xpose.msra.mxu0 0.0
    %279 = vmatprep.subr.mxu0 0.0
    %280 = vmatpush1.xpose.msra.mxu0 0.0
    %281 = vmatprep.subr.mxu0 0.0
    %282 = vmatpush1.xpose.msra.mxu0 0.0
    %283 = vmatprep.subr.mxu0 0.0
    %284 = vmatpush1.xpose.msra.mxu0 0.0
    %285 = vmatprep.subr.mxu0 0.0
    %286 = vmatpush1.xpose.msra.mxu0 0.0
    %287 = vmatprep.subr.mxu0 0.0
    %288 = vmatpush1.xpose.msra.mxu0 0.0
    %289 = vmatprep.subr.mxu0 0.0
    %290 = vmatpush1.xpose.msra.mxu0 0.0
    %291 = vmatprep.subr.mxu0 0.0
    %292 = vmatpush1.xpose.msra.mxu0 0.0
    %293 = vmatprep.subr.mxu0 0.0
    %294 = vmatpush1.xpose.msra.mxu0 0.0
    %295 = vmatprep.subr.mxu0 0.0
    %296 = vmatpush1.xpose.msra.mxu0 0.0
    %297 = vmatprep.mubr.f32.mxu0 %v46
    %298 = vmatmul.mubr.f32.gmra.mrb[0].mxu0 %v45
    %v299 = vpop.f32.mrb[0].mxu0
    %v300 = vadd.f32 %v225, %v299
    %v301 = vpop.f32.mrb[0].mxu0
    %302 = vmatprep.mubr.f32.mxu0 %v52
    %303 = vmatmul.mubr.f32.gmra.mrb[0].mxu0 %v51
    %v304 = vpop.f32.mrb[0].mxu0
    %v305 = vadd.f32 %v230, %v304
    %v306 = vpop.f32.mrb[0].mxu0
    %307 = vdwg.mxu0
    %308 = vmatprep.subr.mxu0 %v60
    %309 = vmatpush1.xpose.msra.mxu0 %v59
    %310 = vmatprep.subr.mxu0 %v66
    %311 = vmatpush1.xpose.msra.mxu0 %v65
    %312 = vmatprep.subr.mxu0 %v72
    %313 = vmatpush1.xpose.msra.mxu0 %v71
    %314 = vmatprep.subr.mxu0 %v78
    %315 = vmatpush1.xpose.msra.mxu0 %v77
    %316 = vmatprep.subr.mxu0 %v84
    %317 = vmatpush1.xpose.msra.mxu0 %v83
    %318 = vmatprep.subr.mxu0 %v90
    %319 = vmatpush1.xpose.msra.mxu0 %v89
    %320 = vmatprep.subr.mxu0 %v96
    %321 = vmatpush1.xpose.msra.mxu0 %v95
    %322 = vmatprep.subr.mxu0 %v102
    %323 = vmatpush1.xpose.msra.mxu0 %v101
    %324 = vmatprep.subr.mxu0 %v108
    %325 = vmatpush1.xpose.msra.mxu0 %v107
    %326 = vmatprep.subr.mxu0 %v114
    %327 = vmatpush1.xpose.msra.mxu0 %v113
    %328 = vmatprep.subr.mxu0 %v120
    %329 = vmatpush1.xpose.msra.mxu0 %v119
    %330 = vmatprep.subr.mxu0 %v126
    %331 = vmatpush1.xpose.msra.mxu0 %v125
    %332 = vmatprep.subr.mxu0 %v132
    %333 = vmatpush1.xpose.msra.mxu0 %v131
    %334 = vmatprep.subr.mxu0 %v138
    %335 = vmatpush1.xpose.msra.mxu0 %v137
    %336 = vmatprep.subr.mxu0 %v144
    %337 = vmatpush1.xpose.msra.mxu0 %v143
    %338 = vmatprep.subr.mxu0 %v150
    %339 = vmatpush1.xpose.msra.mxu0 %v149
    %340 = vmatprep.subr.mxu0 0.0
    %341 = vmatpush1.xpose.msra.mxu0 0.0
    %342 = vmatprep.subr.mxu0 0.0
    %343 = vmatpush1.xpose.msra.mxu0 0.0
    %344 = vmatprep.subr.mxu0 0.0
    %345 = vmatpush1.xpose.msra.mxu0 0.0
    %346 = vmatprep.subr.mxu0 0.0
    %347 = vmatpush1.xpose.msra.mxu0 0.0
    %348 = vmatprep.subr.mxu0 0.0
    %349 = vmatpush1.xpose.msra.mxu0 0.0
    %350 = vmatprep.subr.mxu0 0.0
    %351 = vmatpush1.xpose.msra.mxu0 0.0
    %352 = vmatprep.subr.mxu0 0.0
    %353 = vmatpush1.xpose.msra.mxu0 0.0
    %354 = vmatprep.subr.mxu0 0.0
    %355 = vmatpush1.xpose.msra.mxu0 0.0
    %356 = vmatprep.subr.mxu0 0.0
    %357 = vmatpush1.xpose.msra.mxu0 0.0
    %358 = vmatprep.subr.mxu0 0.0
    %359 = vmatpush1.xpose.msra.mxu0 0.0
    %360 = vmatprep.subr.mxu0 0.0
    %361 = vmatpush1.xpose.msra.mxu0 0.0
    %362 = vmatprep.subr.mxu0 0.0
    %363 = vmatpush1.xpose.msra.mxu0 0.0
    %364 = vmatprep.subr.mxu0 0.0
    %365 = vmatpush1.xpose.msra.mxu0 0.0
    %366 = vmatprep.subr.mxu0 0.0
    %367 = vmatpush1.xpose.msra.mxu0 0.0
    %368 = vmatprep.subr.mxu0 0.0
    %369 = vmatpush1.xpose.msra.mxu0 0.0
    %370 = vmatprep.subr.mxu0 0.0
    %371 = vmatpush1.xpose.msra.mxu0 0.0
    %372 = vmatprep.mubr.f32.mxu0 %v48
    %373 = vmatmul.mubr.f32.gmra.mrb[0].mxu0 %v47
    %v374 = vpop.f32.mrb[0].mxu0
    %v375 = vadd.f32 %v300, %v374
    %v376 = vpop.f32.mrb[0].mxu0
    %377 = vmatprep.mubr.f32.mxu0 %v54
    %378 = vmatmul.mubr.f32.gmra.mrb[0].mxu0 %v53
    %v379 = vpop.f32.mrb[0].mxu0
    %v380 = vadd.f32 %v305, %v379
    %v381 = vpop.f32.mrb[0].mxu0
    %382 = vdwg.mxu0
    %383 = vst [vmem:[#allocation7] sm:$0xff] %v375
    %384 = vst [vmem:[#allocation7 + $0x8] sm:$0xff] %v380
    // Predicated region
    $region22: #{tpu_custom_call.1} parent=1 // pred_check
      _
    $region23: #{tpu_custom_call.1} parent=1 // pred_check_branch
      %386 = sbr.rel (0) target = $region25
    $region24: #{tpu_custom_call.1} parent=1 // pred_region
      %s388 = ssub.s32 256, 256
      %389 = vsyncadd [#allocation4], %s388
      %s390 = sshll.u32 [#allocation7], 4
      %s391 = int_to_ptr.vmem [resolvable:$true] %s390
      %396 = dma.vmem_to_hbm [thread:$0]  %s391, 256, %s3, [#allocation4], 128, 128, 8
    $region25: #{tpu_custom_call.1} parent=1 // pred_fallthru
      _
    // Predicated region
    $region26: #{tpu_custom_call.1} parent=1 // pred_check
      _
    $region27: #{tpu_custom_call.1} parent=1 // pred_check_branch
      %398 = sbr.rel (0) target = $region29
    $region28: #{tpu_custom_call.1} parent=1 // pred_region
      %399 = dma.done [#allocation4], 256
    $region29: #{tpu_custom_call.1} parent=1 // pred_fallthru
      _
    %400 = vsyncpa [#allocation3], 1
    %401 = vsyncpa [#allocation6], 1
    %402 = vsyncpa [#allocation4], 1

</llo_original>
